<compile_context>
chip_gen: v5e
topology: v5e:2x2
jax: 0.10.0
libtpu: 0.0.40
codegen_flags: <defaults>
</compile_context>

<pallas_src>
import jax
import jax.numpy as jnp
from jax.experimental import pallas as pl
from jax.experimental.pallas import tpu as pltpu

STATE_DIM = 72
GOAL_DIM = 32
LATENT_DIM = 256
HIDDEN_DIM = 256  # TODO(synk): ConditionalVAE source not provided; 1-hidden-layer (256, ReLU) Gaussian head assumed.
OUT_WIDTH = 4 * LATENT_DIM  # packed [z | mean | logv | std]


def _cvae_kernel(s0_ref, zg_ref, eps_ref, w1s_ref, w1g_ref, wh_ref, b_ref, out_ref):
    """Fused cVAE prior for one batch tile: split input layer -> fused Gaussian head -> rsample."""
    b1 = b_ref[:, :HIDDEN_DIM]          # (1, 256)   hidden bias
    bh = b_ref[:, HIDDEN_DIM:]          # (1, 512) = [b_mean | b_logv]

    # Input layer: concat(s0, zg) @ W1 expressed as two dots (concat fused away).
    s0 = s0_ref[...].astype(jnp.bfloat16)
    zg = zg_ref[...].astype(jnp.bfloat16)
    h = (jnp.dot(s0, w1s_ref[...], preferred_element_type=jnp.float32)
         + jnp.dot(zg, w1g_ref[...], preferred_element_type=jnp.float32)
         + b1)
    h = jnp.maximum(h, 0.0)                                              # ReLU (f32)

    # Fused Gaussian head: one (256, 512) matmul -> [mean | logv].
    mv = jnp.dot(h.astype(jnp.bfloat16), wh_ref[...],
                 preferred_element_type=jnp.float32) + bh                # (TB, 512)
    mean = mv[:, :LATENT_DIM]
    logv = mv[:, LATENT_DIM:]
    std = jnp.exp(0.5 * logv)
    z = mean + std * eps_ref[...]                                        # rsample

    # Single lane-dense output slab; 256-aligned slices -> unmasked full-vreg stores.
    out_ref[:, 0 * LATENT_DIM:1 * LATENT_DIM] = z
    out_ref[:, 1 * LATENT_DIM:2 * LATENT_DIM] = mean
    out_ref[:, 2 * LATENT_DIM:3 * LATENT_DIM] = logv
    out_ref[:, 3 * LATENT_DIM:4 * LATENT_DIM] = std


def plan_proposer_forward(initial_obv, goal_obv, params, eps):
    """Mirrors PlanProposerModule.forward (goal already encoded to goal_dim).

    Returns (z, dist, mean, logv). dist is the (mean, std) pair standing in for
    torch.distributions.Normal. eps is the externally supplied rsample noise.
    """
    assert initial_obv.shape[-1] == STATE_DIM
    assert goal_obv.shape[-1] == GOAL_DIM
    assert eps.shape[-1] == LATENT_DIM
    B = initial_obv.shape[0]

    # Batch tile: one tile when small; 256-row tiles (fills the MXU) for large rollout batches.
    if B <= 256:
        TB, B_pad = B, B
    else:
        TB = 256
        B_pad = ((B + TB - 1) // TB) * TB
    if B_pad != B:
        pad = B_pad - B
        initial_obv = jnp.pad(initial_obv, ((0, pad), (0, 0)))
        goal_obv = jnp.pad(goal_obv, ((0, pad), (0, 0)))
        eps = jnp.pad(eps, ((0, pad), (0, 0)))

    # Weights/bias use constant index_maps -> DMA'd once, VMEM-resident across all batch tiles.
    # Total resident footprint (bf16 weights ~0.33 MB + one tile's activations) is far under
    # VMEM on v5e/v6e/v7x; no vmem_limit_bytes override needed.
    packed = pl.pallas_call(
        _cvae_kernel,
        out_shape=jax.ShapeDtypeStruct((B_pad, OUT_WIDTH), jnp.float32),
        grid_spec=pltpu.PrefetchScalarGridSpec(
            num_scalar_prefetch=0,
            grid=(B_pad // TB,),
            in_specs=[
                pl.BlockSpec((TB, STATE_DIM), lambda i: (i, 0)),
                pl.BlockSpec((TB, GOAL_DIM), lambda i: (i, 0)),
                pl.BlockSpec((TB, LATENT_DIM), lambda i: (i, 0)),
                pl.BlockSpec((STATE_DIM, HIDDEN_DIM), lambda i: (0, 0)),
                pl.BlockSpec((GOAL_DIM, HIDDEN_DIM), lambda i: (0, 0)),
                pl.BlockSpec((HIDDEN_DIM, 2 * LATENT_DIM), lambda i: (0, 0)),
                pl.BlockSpec((1, HIDDEN_DIM + 2 * LATENT_DIM), lambda i: (0, 0)),
            ],
            out_specs=pl.BlockSpec((TB, OUT_WIDTH), lambda i: (i, 0)),
        ),
        compiler_params=pltpu.CompilerParams(
            dimension_semantics=("parallel",)),   # batch tiles independent -> both v7x TCs
    )(initial_obv, goal_obv, eps,
      params["w1_state"], params["w1_goal"], params["w_head"], params["bias"])

    packed = packed[:B]
    z = packed[:, 0 * LATENT_DIM:1 * LATENT_DIM]
    mean = packed[:, 1 * LATENT_DIM:2 * LATENT_DIM]
    logv = packed[:, 2 * LATENT_DIM:3 * LATENT_DIM]
    std = packed[:, 3 * LATENT_DIM:4 * LATENT_DIM]
    dist = (mean, std)  # torch.distributions.Normal has no in-kernel analogue.
    return z, dist, mean, logv


def init_params(key):
    """Deterministic parameter init (fan-in scaled normals, small random biases)."""
    d_in = STATE_DIM + GOAL_DIM
    k1, k2, k3 = jax.random.split(key, 3)
    w1 = jax.random.normal(k1, (d_in, HIDDEN_DIM), jnp.float32) / jnp.sqrt(d_in)
    w_head = jax.random.normal(k2, (HIDDEN_DIM, 2 * LATENT_DIM), jnp.float32) / jnp.sqrt(HIDDEN_DIM)
    bias = 0.01 * jax.random.normal(k3, (1, HIDDEN_DIM + 2 * LATENT_DIM), jnp.float32)
    return {
        # bf16 weights (MXU-input only; f32 accumulation). Intentional precision change vs the
        # f32 PyTorch module; keep f32 here if bitwise torch parity is required.
        "w1_state": w1[:STATE_DIM].astype(jnp.bfloat16),   # (72, 256)
        "w1_goal": w1[STATE_DIM:].astype(jnp.bfloat16),    # (32, 256)
        "w_head": w_head.astype(jnp.bfloat16),             # (256, 512) = [Wm | Wv]
        "bias": bias,                                       # (1, 768)  = [b1 | bm | bv], f32
    }


if __name__ == "__main__":
    B = 2
    key = jax.random.PRNGKey(0)
    k_param, k_init, k_goal, k_eps = jax.random.split(key, 4)

    params = init_params(k_param)
    initial_obv = jax.random.normal(k_init, (B, STATE_DIM), jnp.float32)   # s_0
    goal_obv = jax.random.normal(k_goal, (B, GOAL_DIM), jnp.float32)       # z (encoded goal)
    eps = jax.random.normal(k_eps, (B, LATENT_DIM), jnp.float32)           # rsample noise

    z, (mean, std), mean_o, logv = plan_proposer_forward(initial_obv, goal_obv, params, eps)
    jax.block_until_ready((z, mean, logv, std))

    # Pure-JAX reference of the fused math (same bf16 weights, f32 accumulation, same eps).
    s0 = initial_obv.astype(jnp.bfloat16)
    zg = goal_obv.astype(jnp.bfloat16)
    b1 = params["bias"][:, :HIDDEN_DIM]
    bh = params["bias"][:, HIDDEN_DIM:]
    h = jnp.maximum(
        jnp.dot(s0, params["w1_state"], preferred_element_type=jnp.float32)
        + jnp.dot(zg, params["w1_goal"], preferred_element_type=jnp.float32) + b1, 0.0)
    mv = jnp.dot(h.astype(jnp.bfloat16), params["w_head"],
                 preferred_element_type=jnp.float32) + bh
    mean_ref, logv_ref = mv[:, :LATENT_DIM], mv[:, LATENT_DIM:]
    std_ref = jnp.exp(0.5 * logv_ref)
    z_ref = mean_ref + std_ref * eps

    assert jnp.allclose(mean, mean_ref, atol=5e-3, rtol=5e-3)
    assert jnp.allclose(mean_o, mean_ref, atol=5e-3, rtol=5e-3)
    assert jnp.allclose(logv, logv_ref, atol=5e-3, rtol=5e-3)
    assert jnp.allclose(std, std_ref, atol=5e-3, rtol=5e-3)
    assert jnp.allclose(z, z_ref, atol=5e-3, rtol=5e-3)

    print("KERNEL_OK")
</pallas_src>

<mosaic_0001>
module attributes {stable_mosaic.version = 11 : i64} {
  func.func @_cvae_kernel(%arg0: i32, %arg1: memref<2x72xf32, #tpu.memory_space<vmem>>, %arg2: memref<2x32xf32, #tpu.memory_space<vmem>>, %arg3: memref<2x256xf32, #tpu.memory_space<vmem>>, %arg4: memref<72x256xbf16, #tpu.memory_space<vmem>>, %arg5: memref<32x256xbf16, #tpu.memory_space<vmem>>, %arg6: memref<256x512xbf16, #tpu.memory_space<vmem>>, %arg7: memref<1x768xf32, #tpu.memory_space<vmem>>, %arg8: memref<2x1024xf32, #tpu.memory_space<vmem>>) attributes {dimension_semantics = [#tpu.dimension_semantics<parallel>], iteration_bounds = array<i64: 1>, scalar_prefetch = 0 : i64, scratch_operands = 0 : i64, tpu.core_type = #tpu.core_type<tc>, window_params = [{transform_indices = @transform_0, window_bounds = array<i64: 2, 72>}, {transform_indices = @transform_1, window_bounds = array<i64: 2, 32>}, {transform_indices = @transform_2, window_bounds = array<i64: 2, 256>}, {pipeline_mode = #tpu.pipeline_mode<synchronous>, transform_indices = @transform_3, window_bounds = array<i64: 72, 256>}, {pipeline_mode = #tpu.pipeline_mode<synchronous>, transform_indices = @transform_4, window_bounds = array<i64: 32, 256>}, {pipeline_mode = #tpu.pipeline_mode<synchronous>, transform_indices = @transform_5, window_bounds = array<i64: 256, 512>}, {pipeline_mode = #tpu.pipeline_mode<synchronous>, transform_indices = @transform_6, window_bounds = array<i64: 1, 768>}, {transform_indices = @transform_7, window_bounds = array<i64: 2, 1024>}]} {
    %c0 = arith.constant 0 : index
    %c0_0 = arith.constant 0 : index
    %0 = vector.load %arg7[%c0, %c0_0] : memref<1x768xf32, #tpu.memory_space<vmem>>, vector<1x256xf32>
    %c0_1 = arith.constant 0 : index
    %c256 = arith.constant 256 : index
    %1 = vector.load %arg7[%c0_1, %c256] : memref<1x768xf32, #tpu.memory_space<vmem>>, vector<1x512xf32>
    %c0_2 = arith.constant 0 : index
    %c0_3 = arith.constant 0 : index
    %2 = vector.load %arg1[%c0_2, %c0_3] : memref<2x72xf32, #tpu.memory_space<vmem>>, vector<2x72xf32>
    %3 = arith.truncf %2 : vector<2x72xf32> to vector<2x72xbf16>
    %c0_4 = arith.constant 0 : index
    %c0_5 = arith.constant 0 : index
    %4 = vector.load %arg2[%c0_4, %c0_5] : memref<2x32xf32, #tpu.memory_space<vmem>>, vector<2x32xf32>
    %5 = arith.truncf %4 : vector<2x32xf32> to vector<2x32xbf16>
    %c0_6 = arith.constant 0 : index
    %c0_7 = arith.constant 0 : index
    %6 = vector.load %arg4[%c0_6, %c0_7] : memref<72x256xbf16, #tpu.memory_space<vmem>>, vector<72x256xbf16>
    %cst = arith.constant dense<0.000000e+00> : vector<2x256xf32>
    %7 = tpu.matmul %3, %6, %cst {dimension_numbers = #tpu.dot_dimension_numbers<[1], [0], [0], [1], [0, 0, 1, 1], [], []>} : vector<2x72xbf16>, vector<72x256xbf16>, vector<2x256xf32> -> vector<2x256xf32>
    %c0_8 = arith.constant 0 : index
    %c0_9 = arith.constant 0 : index
    %8 = vector.load %arg5[%c0_8, %c0_9] : memref<32x256xbf16, #tpu.memory_space<vmem>>, vector<32x256xbf16>
    %cst_10 = arith.constant dense<0.000000e+00> : vector<2x256xf32>
    %9 = tpu.matmul %5, %8, %cst_10 {dimension_numbers = #tpu.dot_dimension_numbers<[1], [0], [0], [1], [0, 0, 1, 1], [], []>} : vector<2x32xbf16>, vector<32x256xbf16>, vector<2x256xf32> -> vector<2x256xf32>
    %10 = arith.addf %7, %9 : vector<2x256xf32>
    %11 = vector.broadcast %0 : vector<1x256xf32> to vector<2x256xf32>
    %12 = arith.addf %10, %11 : vector<2x256xf32>
    %cst_11 = arith.constant 0.000000e+00 : f32
    %13 = vector.broadcast %cst_11 : f32 to vector<2x256xf32>
    %14 = arith.maximumf %12, %13 : vector<2x256xf32>
    %15 = arith.truncf %14 : vector<2x256xf32> to vector<2x256xbf16>
    %c0_12 = arith.constant 0 : index
    %c0_13 = arith.constant 0 : index
    %16 = vector.load %arg6[%c0_12, %c0_13] : memref<256x512xbf16, #tpu.memory_space<vmem>>, vector<256x512xbf16>
    %cst_14 = arith.constant dense<0.000000e+00> : vector<2x512xf32>
    %17 = tpu.matmul %15, %16, %cst_14 {dimension_numbers = #tpu.dot_dimension_numbers<[1], [0], [0], [1], [0, 0, 1, 1], [], []>} : vector<2x256xbf16>, vector<256x512xbf16>, vector<2x512xf32> -> vector<2x512xf32>
    %18 = vector.broadcast %1 : vector<1x512xf32> to vector<2x512xf32>
    %19 = arith.addf %17, %18 : vector<2x512xf32>
    %20 = vector.extract_strided_slice %19 {offsets = [0, 0], sizes = [2, 256], strides = [1, 1]} : vector<2x512xf32> to vector<2x256xf32>
    %21 = vector.extract_strided_slice %19 {offsets = [0, 256], sizes = [2, 256], strides = [1, 1]} : vector<2x512xf32> to vector<2x256xf32>
    %cst_15 = arith.constant 5.000000e-01 : f32
    %22 = vector.broadcast %cst_15 : f32 to vector<2x256xf32>
    %23 = arith.mulf %22, %21 : vector<2x256xf32>
    %24 = math.exp %23 : vector<2x256xf32>
    %c0_16 = arith.constant 0 : index
    %c0_17 = arith.constant 0 : index
    %25 = vector.load %arg3[%c0_16, %c0_17] : memref<2x256xf32, #tpu.memory_space<vmem>>, vector<2x256xf32>
    %26 = arith.mulf %24, %25 : vector<2x256xf32>
    %27 = arith.addf %20, %26 : vector<2x256xf32>
    %c0_18 = arith.constant 0 : index
    %c0_19 = arith.constant 0 : index
    %28 = vector.load %arg8[%c0_18, %c0_19] : memref<2x1024xf32, #tpu.memory_space<vmem>>, vector<2x256xf32>
    tpu.vector_store %arg8[%c0_18, %c0_19], %27 {strides = array<i32>} : memref<2x1024xf32, #tpu.memory_space<vmem>>, vector<2x256xf32>,
    %c0_20 = arith.constant 0 : index
    %c256_21 = arith.constant 256 : index
    %29 = vector.load %arg8[%c0_20, %c256_21] : memref<2x1024xf32, #tpu.memory_space<vmem>>, vector<2x256xf32>
    tpu.vector_store %arg8[%c0_20, %c256_21], %20 {strides = array<i32>} : memref<2x1024xf32, #tpu.memory_space<vmem>>, vector<2x256xf32>,
    %c0_22 = arith.constant 0 : index
    %c512 = arith.constant 512 : index
    %30 = vector.load %arg8[%c0_22, %c512] : memref<2x1024xf32, #tpu.memory_space<vmem>>, vector<2x256xf32>
    tpu.vector_store %arg8[%c0_22, %c512], %21 {strides = array<i32>} : memref<2x1024xf32, #tpu.memory_space<vmem>>, vector<2x256xf32>,
    %c0_23 = arith.constant 0 : index
    %c768 = arith.constant 768 : index
    %31 = vector.load %arg8[%c0_23, %c768] : memref<2x1024xf32, #tpu.memory_space<vmem>>, vector<2x256xf32>
    tpu.vector_store %arg8[%c0_23, %c768], %24 {strides = array<i32>} : memref<2x1024xf32, #tpu.memory_space<vmem>>, vector<2x256xf32>,
    return
  }
  func.func @transform_0(%arg0: i32) -> (i32, i32) {
    %c0_i32 = arith.constant 0 : i32
    %c0_i32_0 = arith.constant 0 : i32
    return %arg0, %c0_i32 : i32, i32
  }
  func.func @transform_1(%arg0: i32) -> (i32, i32) {
    %c0_i32 = arith.constant 0 : i32
    %c0_i32_0 = arith.constant 0 : i32
    return %arg0, %c0_i32 : i32, i32
  }
  func.func @transform_2(%arg0: i32) -> (i32, i32) {
    %c0_i32 = arith.constant 0 : i32
    %c0_i32_0 = arith.constant 0 : i32
    return %arg0, %c0_i32 : i32, i32
  }
  func.func @transform_3(%arg0: i32) -> (i32, i32) {
    %c0_i32 = arith.constant 0 : i32
    %c0_i32_0 = arith.constant 0 : i32
    %c0_i32_1 = arith.constant 0 : i32
    return %c0_i32, %c0_i32_0 : i32, i32
  }
  func.func @transform_4(%arg0: i32) -> (i32, i32) {
    %c0_i32 = arith.constant 0 : i32
    %c0_i32_0 = arith.constant 0 : i32
    %c0_i32_1 = arith.constant 0 : i32
    return %c0_i32, %c0_i32_0 : i32, i32
  }
  func.func @transform_5(%arg0: i32) -> (i32, i32) {
    %c0_i32 = arith.constant 0 : i32
    %c0_i32_0 = arith.constant 0 : i32
    %c0_i32_1 = arith.constant 0 : i32
    return %c0_i32, %c0_i32_0 : i32, i32
  }
  func.func @transform_6(%arg0: i32) -> (i32, i32) {
    %c0_i32 = arith.constant 0 : i32
    %c0_i32_0 = arith.constant 0 : i32
    %c0_i32_1 = arith.constant 0 : i32
    return %c0_i32, %c0_i32_0 : i32, i32
  }
  func.func @transform_7(%arg0: i32) -> (i32, i32) {
    %c0_i32 = arith.constant 0 : i32
    %c0_i32_0 = arith.constant 0 : i32
    return %arg0, %c0_i32 : i32, i32
  }
}

</mosaic_0001>

<llo_original>
// kernel: tpu_custom_call.1
$region0: #{tpu_custom_call.1}
  #allocation0 [shape = 'u32[]', space=smem, size = 0x4, offset = 0x4, fixed_abs, tag = 'smem constant byte address 0x4 - core index']
  #allocation1 [shape = 'u32[72,128]{1,0:T(1,128)}', space=vmem, size = 0x9000, scoped, tag = 'internal scratch']
  %s0 = inlined_call_operand.hbm [shape: f32[2,72], index: 0, kind: input, shape index: {}]
  %s1 = inlined_call_operand.hbm [shape: f32[2,32], index: 1, kind: input, shape index: {}]
  %s2 = inlined_call_operand.hbm [shape: f32[2,256], index: 2, kind: input, shape index: {}]
  %s3 = inlined_call_operand.hbm [shape: bf16[72,256], index: 3, kind: input, shape index: {}]
  %s4 = inlined_call_operand.hbm [shape: bf16[32,256], index: 4, kind: input, shape index: {}]
  %s5 = inlined_call_operand.hbm [shape: bf16[256,512], index: 5, kind: input, shape index: {}]
  %s6 = inlined_call_operand.hbm [shape: f32[1,768], index: 6, kind: input, shape index: {}]
  %s7 = inlined_call_operand.hbm [shape: f32[2,1024], index: 7, kind: output, shape index: {}]
  %s8 = sld [smem:[#allocation0]]
  $region66: #{tpu_custom_call.1} parent=0
    _
  %s10 = ssub.s32 1, %s8
  %s11 = scalar_select 0, %s10, %s8
  $region1: #{tpu_custom_call.1} parent=0
    #allocation2 [shape = 'u8[1024]{0}', space=vmem, size = 0x400, scoped, tag = 'input window, operand 0, single buffered']
    #allocation3 [shape = 's32[1]{0}', space=sflag, size = 0x4, scoped, tag = 'scoped memory for tpu_custom_call.1']
    #allocation4 [shape = 's32[1]{0}', space=sflag, size = 0x4, scoped, tag = 'scoped memory for tpu_custom_call.1']
    #allocation5 [shape = 'u8[1024]{0}', space=vmem, size = 0x400, scoped, tag = 'input window, operand 1, single buffered']
    #allocation6 [shape = 's32[1]{0}', space=sflag, size = 0x4, scoped, tag = 'scoped memory for tpu_custom_call.1']
    #allocation7 [shape = 'u8[2048]{0}', space=vmem, size = 0x800, scoped, tag = 'input window, operand 2, single buffered']
    #allocation8 [shape = 'u8[36864]{0}', space=vmem, size = 0x9000, scoped, tag = 'input window, operand 3, single buffered']
    #allocation9 [shape = 's32[1]{0}', space=sflag, size = 0x4, scoped, tag = 'scoped memory for tpu_custom_call.1']
    #allocation10 [shape = 'u8[16384]{0}', space=vmem, size = 0x4000, scoped, tag = 'input window, operand 4, single buffered']
    #allocation11 [shape = 'u8[262144]{0}', space=vmem, size = 0x40000, scoped, tag = 'input window, operand 5, single buffered']
    #allocation12 [shape = 's32[1]{0}', space=sflag, size = 0x4, scoped, tag = 'scoped memory for tpu_custom_call.1']
    #allocation13 [shape = 'u8[3072]{0}', space=vmem, size = 0xc00, scoped, tag = 'input window, operand 6, single buffered']
    #allocation14 [shape = 'u8[8192]{0}', space=vmem, size = 0x2000, scoped, tag = 'output window, operand 0, single buffered']
    %12 = vsyncpa [#allocation3], 0
    %13 = vsyncpa [#allocation6], 0
    %14 = vsyncpa [#allocation9], 0
    %15 = vsyncpa [#allocation12], 0
    %16 = vsyncpa [#allocation4], 0
    // Predicated region
    $region2: #{tpu_custom_call.1} parent=1 // pred_check
      _
    $region3: #{tpu_custom_call.1} parent=1 // pred_check_branch
      %18 = sbr.rel (0) target = $region5
    $region4: #{tpu_custom_call.1} parent=1 // pred_region
      %20 = vsyncadd [#allocation3], 0
      %s22 = sshll.u32 %s0, 4
      %s23 = int_to_ptr.hbm [resolvable:$true] %s22
      %s24 = sshll.u32 [#allocation2], 4
      %s25 = int_to_ptr.vmem [resolvable:$true] %s24
      %27 = dma.hbm_to_vmem [thread:$0]  %s23, 32, %s25, [#allocation3]
    $region5: #{tpu_custom_call.1} parent=1 // pred_fallthru
      _
    // Predicated region
    $region6: #{tpu_custom_call.1} parent=1 // pred_check
      _
    $region7: #{tpu_custom_call.1} parent=1 // pred_check_branch
      %29 = sbr.rel (0) target = $region9
    $region8: #{tpu_custom_call.1} parent=1 // pred_region
      %31 = vsyncadd [#allocation6], 0
      %s33 = sshll.u32 %s1, 4
      %s34 = int_to_ptr.hbm [resolvable:$true] %s33
      %s35 = sshll.u32 [#allocation5], 4
      %s36 = int_to_ptr.vmem [resolvable:$true] %s35
      %38 = dma.hbm_to_vmem [thread:$0]  %s34, 32, %s36, [#allocation6]
    $region9: #{tpu_custom_call.1} parent=1 // pred_fallthru
      _
    // Predicated region
    $region10: #{tpu_custom_call.1} parent=1 // pred_check
      _
    $region11: #{tpu_custom_call.1} parent=1 // pred_check_branch
      %40 = sbr.rel (0) target = $region13
    $region12: #{tpu_custom_call.1} parent=1 // pred_region
      %42 = vsyncadd [#allocation6], 0
      %s44 = sshll.u32 %s2, 4
      %s45 = int_to_ptr.hbm [resolvable:$true] %s44
      %s46 = sshll.u32 [#allocation7], 4
      %s47 = int_to_ptr.vmem [resolvable:$true] %s46
      %49 = dma.hbm_to_vmem [thread:$0]  %s45, 64, %s47, [#allocation6]
    $region13: #{tpu_custom_call.1} parent=1 // pred_fallthru
      _
    // Predicated region
    $region14: #{tpu_custom_call.1} parent=1 // pred_check
      _
    $region15: #{tpu_custom_call.1} parent=1 // pred_check_branch
      %51 = sbr.rel (0) target = $region17
    $region16: #{tpu_custom_call.1} parent=1 // pred_region
      %53 = vsyncadd [#allocation9], 0
      %s54 = sshll.u32 %s3, 4
      %s55 = int_to_ptr.hbm [resolvable:$true] %s54
      %s56 = sshll.u32 [#allocation8], 4
      %s57 = int_to_ptr.vmem [resolvable:$true] %s56
      %62 = dma.hbm_to_vmem [thread:$0]  %s55, 1152, %s57, [#allocation9], 128, 128, 8
    $region17: #{tpu_custom_call.1} parent=1 // pred_fallthru
      _
    // Predicated region
    $region18: #{tpu_custom_call.1} parent=1 // pred_check
      _
    $region19: #{tpu_custom_call.1} parent=1 // pred_check_branch
      %64 = sbr.rel (0) target = $region21
    $region20: #{tpu_custom_call.1} parent=1 // pred_region
      %66 = vsyncadd [#allocation9], 0
      %s67 = sshll.u32 %s4, 4
      %s68 = int_to_ptr.hbm [resolvable:$true] %s67
      %s69 = sshll.u32 [#allocation10], 4
      %s70 = int_to_ptr.vmem [resolvable:$true] %s69
      %75 = dma.hbm_to_vmem [thread:$0]  %s68, 512, %s70, [#allocation9], 128, 128, 8
    $region21: #{tpu_custom_call.1} parent=1 // pred_fallthru
      _
    // Predicated region
    $region22: #{tpu_custom_call.1} parent=1 // pred_check
      _
    $region23: #{tpu_custom_call.1} parent=1 // pred_check_branch
      %77 = sbr.rel (0) target = $region25
    $region24: #{tpu_custom_call.1} parent=1 // pred_region
      %79 = vsyncadd [#allocation12], 0
      %s80 = sshll.u32 %s5, 4
      %s81 = int_to_ptr.hbm [resolvable:$true] %s80
      %s82 = sshll.u32 [#allocation11], 4
      %s83 = int_to_ptr.vmem [resolvable:$true] %s82
      %88 = dma.hbm_to_vmem [thread:$0]  %s81, 8192, %s83, [#allocation12], 256, 256, 16
    $region25: #{tpu_custom_call.1} parent=1 // pred_fallthru
      _
    // Predicated region
    $region26: #{tpu_custom_call.1} parent=1 // pred_check
      _
    $region27: #{tpu_custom_call.1} parent=1 // pred_check_branch
      %90 = sbr.rel (0) target = $region29
    $region28: #{tpu_custom_call.1} parent=1 // pred_region
      %92 = vsyncadd [#allocation12], 0
      %s94 = sshll.u32 %s6, 4
      %s95 = int_to_ptr.hbm [resolvable:$true] %s94
      %s96 = sshll.u32 [#allocation13], 4
      %s97 = int_to_ptr.vmem [resolvable:$true] %s96
      %99 = dma.hbm_to_vmem [thread:$0]  %s95, 96, %s97, [#allocation12]
    $region29: #{tpu_custom_call.1} parent=1 // pred_fallthru
      _
    // Predicated region
    $region30: #{tpu_custom_call.1} parent=1 // pred_check
      _
    $region31: #{tpu_custom_call.1} parent=1 // pred_check_branch
      %101 = sbr.rel (0) target = $region33
    $region32: #{tpu_custom_call.1} parent=1 // pred_region
      %103 = dma.done [#allocation3], 32
    $region33: #{tpu_custom_call.1} parent=1 // pred_fallthru
      _
    // Predicated region
    $region34: #{tpu_custom_call.1} parent=1 // pred_check
      _
    $region35: #{tpu_custom_call.1} parent=1 // pred_check_branch
      %105 = sbr.rel (0) target = $region37
    $region36: #{tpu_custom_call.1} parent=1 // pred_region
      %107 = dma.done [#allocation6], 32
    $region37: #{tpu_custom_call.1} parent=1 // pred_fallthru
      _
    // Predicated region
    $region38: #{tpu_custom_call.1} parent=1 // pred_check
      _
    $region39: #{tpu_custom_call.1} parent=1 // pred_check_branch
      %109 = sbr.rel (0) target = $region41
    $region40: #{tpu_custom_call.1} parent=1 // pred_region
      %111 = dma.done [#allocation6], 64
    $region41: #{tpu_custom_call.1} parent=1 // pred_fallthru
      _
    // Predicated region
    $region42: #{tpu_custom_call.1} parent=1 // pred_check
      _
    $region43: #{tpu_custom_call.1} parent=1 // pred_check_branch
      %113 = sbr.rel (0) target = $region45
    $region44: #{tpu_custom_call.1} parent=1 // pred_region
      %115 = dma.done [#allocation9], 1152
    $region45: #{tpu_custom_call.1} parent=1 // pred_fallthru
      _
    // Predicated region
    $region46: #{tpu_custom_call.1} parent=1 // pred_check
      _
    $region47: #{tpu_custom_call.1} parent=1 // pred_check_branch
      %117 = sbr.rel (0) target = $region49
    $region48: #{tpu_custom_call.1} parent=1 // pred_region
      %119 = dma.done [#allocation9], 512
    $region49: #{tpu_custom_call.1} parent=1 // pred_fallthru
      _
    // Predicated region
    $region50: #{tpu_custom_call.1} parent=1 // pred_check
      _
    $region51: #{tpu_custom_call.1} parent=1 // pred_check_branch
      %121 = sbr.rel (0) target = $region53
    $region52: #{tpu_custom_call.1} parent=1 // pred_region
      %123 = dma.done [#allocation12], 8192
    $region53: #{tpu_custom_call.1} parent=1 // pred_fallthru
      _
    // Predicated region
    $region54: #{tpu_custom_call.1} parent=1 // pred_check
      _
    $region55: #{tpu_custom_call.1} parent=1 // pred_check_branch
      %125 = sbr.rel (0) target = $region57
    $region56: #{tpu_custom_call.1} parent=1 // pred_region
      %127 = dma.done [#allocation12], 96
    $region57: #{tpu_custom_call.1} parent=1 // pred_fallthru
      _
    %v129 = vld [vmem:[#allocation13] sm:$0x3]
    %v130 = vld [vmem:[#allocation13 + $0x2] sm:$0xf]
    %v131 = vld [vmem:[#allocation2] sm:$0x3]
    %v132 = vpack.c.bf16 %v131, %v131
    %v133 = vld [vmem:[#allocation5] sm:$0x3]
    %v134 = vpack.c.bf16 %v133, %v133
    %v135 = vld [vmem:[#allocation8] sm:$0xff]
    %v136 = vld [vmem:[#allocation8 + $0x8] sm:$0xff]
    %v137 = vld [vmem:[#allocation8 + $0x10] sm:$0xff]
    %v138 = vld [vmem:[#allocation8 + $0x18] sm:$0xff]
    %v139 = vld [vmem:[#allocation8 + $0x20] sm:$0xff]
    %v140 = vld [vmem:[#allocation8 + $0x28] sm:$0xff]
    %v141 = vld [vmem:[#allocation8 + $0x30] sm:$0xff]
    %v142 = vld [vmem:[#allocation8 + $0x38] sm:$0xff]
    %v143 = vld [vmem:[#allocation8 + $0x40] sm:$0xff]
    %v144 = vld [vmem:[#allocation10] sm:$0xff]
    %v145 = vld [vmem:[#allocation10 + $0x8] sm:$0xff]
    %v146 = vld [vmem:[#allocation10 + $0x10] sm:$0xff]
    %v147 = vld [vmem:[#allocation10 + $0x18] sm:$0xff]
    %v152 = vunpack.c.l.b16 %v144
    %v153 = vunpack.c.h.b16 %v144
    %v154 = vunpack.c.l.b16 %v145
    %v155 = vunpack.c.h.b16 %v145
    %v156 = vunpack.c.l.b16 %v146
    %v157 = vunpack.c.h.b16 %v146
    %v158 = vunpack.c.l.b16 %v147
    %v159 = vunpack.c.h.b16 %v147
    %v160 = vpack.c.b16 %v154, %v152
    %v161 = vpack.c.b16 %v155, %v153
    %v162 = vpack.c.b16 %v158, %v156
    %v163 = vpack.c.b16 %v159, %v157
    %vm168 = vcmask 261120
    %v170 = vsel %vm168, %v134, 0
    %172 = vmatpush.bf16.msra.mxu0 0
    %173 = vmatpush.bf16.msra.mxu0 0
    %174 = vmatpush.bf16.msra.mxu0 0
    %175 = vmatpush.bf16.msra.mxu0 0
    %176 = vmatpush.bf16.msra.mxu0 0
    %177 = vmatpush.bf16.msra.mxu0 0
    %178 = vmatpush.bf16.msra.mxu0 %v162
    %179 = vmatpush.bf16.msra.mxu0 %v160
    %180 = vmatmul.bf16.gmra.mxu0 %v170
    %v181 = vpop.f32.mrf.mxu0
    %v182 = vadd.f32 0.0, %v181
    %v183 = vpop.f32.mrf.mxu0
    %184 = vdwg.mxu0
    %185 = vmatpush.bf16.msra.mxu0 0
    %186 = vmatpush.bf16.msra.mxu0 0
    %187 = vmatpush.bf16.msra.mxu0 0
    %188 = vmatpush.bf16.msra.mxu0 0
    %189 = vmatpush.bf16.msra.mxu0 0
    %190 = vmatpush.bf16.msra.mxu0 0
    %191 = vmatpush.bf16.msra.mxu0 %v163
    %192 = vmatpush.bf16.msra.mxu0 %v161
    %193 = vmatmul.bf16.gmra.mxu0 %v170
    %v194 = vpop.f32.mrf.mxu0
    %v195 = vadd.f32 0.0, %v194
    %v196 = vpop.f32.mrf.mxu0
    %197 = vdwg.mxu0
    %v207 = vunpack.c.l.b16 %v135
    %v208 = vunpack.c.h.b16 %v135
    %v209 = vunpack.c.l.b16 %v136
    %v210 = vunpack.c.h.b16 %v136
    %v211 = vunpack.c.l.b16 %v137
    %v212 = vunpack.c.h.b16 %v137
    %v213 = vunpack.c.l.b16 %v138
    %v214 = vunpack.c.h.b16 %v138
    %v215 = vunpack.c.l.b16 %v139
    %v216 = vunpack.c.h.b16 %v139
    %v217 = vunpack.c.l.b16 %v140
    %v218 = vunpack.c.h.b16 %v140
    %v219 = vunpack.c.l.b16 %v141
    %v220 = vunpack.c.h.b16 %v141
    %v221 = vunpack.c.l.b16 %v142
    %v222 = vunpack.c.h.b16 %v142
    %v223 = vunpack.c.l.b16 %v143
    %v224 = vunpack.c.h.b16 %v143
    %v225 = vpack.c.b16 %v209, %v207
    %v226 = vpack.c.b16 %v210, %v208
    %v227 = vpack.c.b16 %v213, %v211
    %v228 = vpack.c.b16 %v214, %v212
    %v229 = vpack.c.b16 %v217, %v215
    %v230 = vpack.c.b16 %v218, %v216
    %v231 = vpack.c.b16 %v221, %v219
    %v232 = vpack.c.b16 %v222, %v220
    %v233 = vpack.c.b16 %v223, %v223
    %v234 = vpack.c.b16 %v224, %v224
    %vm243 = vcmask 588800
    %v245 = vsel %vm243, %v132, 0
    %vm247 = vcmask 1043456
    %v249 = vsel %vm247, %v233, 0
    %v252 = vsel %vm247, %v234, 0
    %254 = vmatpush.bf16.msra.mxu0 0
    %255 = vmatpush.bf16.msra.mxu0 0
    %256 = vmatpush.bf16.msra.mxu0 0
    %257 = vmatpush.bf16.msra.mxu0 %v249
    %258 = vmatpush.bf16.msra.mxu0 %v231
    %259 = vmatpush.bf16.msra.mxu0 %v229
    %260 = vmatpush.bf16.msra.mxu0 %v227
    %261 = vmatpush.bf16.msra.mxu0 %v225
    %262 = vmatmul.bf16.gmra.mxu0 %v245
    %v263 = vpop.f32.mrf.mxu0
    %v264 = vadd.f32 %v182, %v263
    %v265 = vpop.f32.mrf.mxu0
    %266 = vdwg.mxu0
    %267 = vmatpush.bf16.msra.mxu0 0
    %268 = vmatpush.bf16.msra.mxu0 0
    %269 = vmatpush.bf16.msra.mxu0 0
    %270 = vmatpush.bf16.msra.mxu0 %v252
    %271 = vmatpush.bf16.msra.mxu0 %v232
    %272 = vmatpush.bf16.msra.mxu0 %v230
    %273 = vmatpush.bf16.msra.mxu0 %v228
    %274 = vmatpush.bf16.msra.mxu0 %v226
    %275 = vmatmul.bf16.gmra.mxu0 %v245
    %v276 = vpop.f32.mrf.mxu0
    %v277 = vadd.f32 %v195, %v276
    %v278 = vpop.f32.mrf.mxu0
    %279 = vdwg.mxu0
    %v281 = vperm.slane %v129, 0
    %v282 = vperm.slane %v129, 1
    %v285 = vadd.f32 %v264, %v281
    %v286 = vadd.f32 %v277, %v282
    %v287 = vmax.f32 %v285, 0.0
    %v288 = vmax.f32 %v286, 0.0
    %v289 = vpack.c.bf16 %v287, %v287
    %v290 = vpack.c.bf16 %v288, %v288
    %v291 = vld [vmem:[#allocation11] sm:$0xff]
    %v292 = vld [vmem:[#allocation11 + $0x8] sm:$0xff]
    %v293 = vld [vmem:[#allocation11 + $0x10] sm:$0xff]
    %v294 = vld [vmem:[#allocation11 + $0x18] sm:$0xff]
    %v295 = vld [vmem:[#allocation11 + $0x20] sm:$0xff]
    %v296 = vld [vmem:[#allocation11 + $0x28] sm:$0xff]
    %v297 = vld [vmem:[#allocation11 + $0x30] sm:$0xff]
    %v298 = vld [vmem:[#allocation11 + $0x38] sm:$0xff]
    %v299 = vld [vmem:[#allocation11 + $0x40] sm:$0xff]
    %v300 = vld [vmem:[#allocation11 + $0x48] sm:$0xff]
    %v301 = vld [vmem:[#allocation11 + $0x50] sm:$0xff]
    %v302 = vld [vmem:[#allocation11 + $0x58] sm:$0xff]
    %v303 = vld [vmem:[#allocation11 + $0x60] sm:$0xff]
    %v304 = vld [vmem:[#allocation11 + $0x68] sm:$0xff]
    %v305 = vld [vmem:[#allocation11 + $0x70] sm:$0xff]
    %v306 = vld [vmem:[#allocation11 + $0x78] sm:$0xff]
    %v307 = vld [vmem:[#allocation11 + $0x80] sm:$0xff]
    %v308 = vld [vmem:[#allocation11 + $0x88] sm:$0xff]
    %v309 = vld [vmem:[#allocation11 + $0x90] sm:$0xff]
    %v310 = vld [vmem:[#allocation11 + $0x98] sm:$0xff]
    %v311 = vld [vmem:[#allocation11 + $0xa0] sm:$0xff]
    %v312 = vld [vmem:[#allocation11 + $0xa8] sm:$0xff]
    %v313 = vld [vmem:[#allocation11 + $0xb0] sm:$0xff]
    %v314 = vld [vmem:[#allocation11 + $0xb8] sm:$0xff]
    %v315 = vld [vmem:[#allocation11 + $0xc0] sm:$0xff]
    %v316 = vld [vmem:[#allocation11 + $0xc8] sm:$0xff]
    %v317 = vld [vmem:[#allocation11 + $0xd0] sm:$0xff]
    %v318 = vld [vmem:[#allocation11 + $0xd8] sm:$0xff]
    %v319 = vld [vmem:[#allocation11 + $0xe0] sm:$0xff]
    %v320 = vld [vmem:[#allocation11 + $0xe8] sm:$0xff]
    %v321 = vld [vmem:[#allocation11 + $0xf0] sm:$0xff]
    %v322 = vld [vmem:[#allocation11 + $0xf8] sm:$0xff]
    %v323 = vld [vmem:[#allocation11 + $0x100] sm:$0xff]
    %v324 = vld [vmem:[#allocation11 + $0x108] sm:$0xff]
    %v325 = vld [vmem:[#allocation11 + $0x110] sm:$0xff]
    %v326 = vld [vmem:[#allocation11 + $0x118] sm:$0xff]
    %v327 = vld [vmem:[#allocation11 + $0x120] sm:$0xff]
    %v328 = vld [vmem:[#allocation11 + $0x128] sm:$0xff]
    %v329 = vld [vmem:[#allocation11 + $0x130] sm:$0xff]
    %v330 = vld [vmem:[#allocation11 + $0x138] sm:$0xff]
    %v331 = vld [vmem:[#allocation11 + $0x140] sm:$0xff]
    %v332 = vld [vmem:[#allocation11 + $0x148] sm:$0xff]
    %v333 = vld [vmem:[#allocation11 + $0x150] sm:$0xff]
    %v334 = vld [vmem:[#allocation11 + $0x158] sm:$0xff]
    %v335 = vld [vmem:[#allocation11 + $0x160] sm:$0xff]
    %v336 = vld [vmem:[#allocation11 + $0x168] sm:$0xff]
    %v337 = vld [vmem:[#allocation11 + $0x170] sm:$0xff]
    %v338 = vld [vmem:[#allocation11 + $0x178] sm:$0xff]
    %v339 = vld [vmem:[#allocation11 + $0x180] sm:$0xff]
    %v340 = vld [vmem:[#allocation11 + $0x188] sm:$0xff]
    %v341 = vld [vmem:[#allocation11 + $0x190] sm:$0xff]
    %v342 = vld [vmem:[#allocation11 + $0x198] sm:$0xff]
    %v343 = vld [vmem:[#allocation11 + $0x1a0] sm:$0xff]
    %v344 = vld [vmem:[#allocation11 + $0x1a8] sm:$0xff]
    %v345 = vld [vmem:[#allocation11 + $0x1b0] sm:$0xff]
    %v346 = vld [vmem:[#allocation11 + $0x1b8] sm:$0xff]
    %v347 = vld [vmem:[#allocation11 + $0x1c0] sm:$0xff]
    %v348 = vld [vmem:[#allocation11 + $0x1c8] sm:$0xff]
    %v349 = vld [vmem:[#allocation11 + $0x1d0] sm:$0xff]
    %v350 = vld [vmem:[#allocation11 + $0x1d8] sm:$0xff]
    %v351 = vld [vmem:[#allocation11 + $0x1e0] sm:$0xff]
    %v352 = vld [vmem:[#allocation11 + $0x1e8] sm:$0xff]
    %v353 = vld [vmem:[#allocation11 + $0x1f0] sm:$0xff]
    %v354 = vld [vmem:[#allocation11 + $0x1f8] sm:$0xff]
    %v356 = vperm.slane %v130, 0
    %v357 = vperm.slane %v130, 1
    %v358 = vperm.slane %v130, 2
    %v359 = vperm.slane %v130, 3
    %v428 = vunpack.c.l.b16 %v291
    %v429 = vunpack.c.h.b16 %v291
    %v430 = vunpack.c.l.b16 %v292
    %v431 = vunpack.c.h.b16 %v292
    %v432 = vunpack.c.l.b16 %v293
    %v433 = vunpack.c.h.b16 %v293
    %v434 = vunpack.c.l.b16 %v294
    %v435 = vunpack.c.h.b16 %v294
    %v436 = vunpack.c.l.b16 %v295
    %v437 = vunpack.c.h.b16 %v295
    %v438 = vunpack.c.l.b16 %v296
    %v439 = vunpack.c.h.b16 %v296
    %v440 = vunpack.c.l.b16 %v297
    %v441 = vunpack.c.h.b16 %v297
    %v442 = vunpack.c.l.b16 %v298
    %v443 = vunpack.c.h.b16 %v298
    %v444 = vunpack.c.l.b16 %v299
    %v445 = vunpack.c.h.b16 %v299
    %v446 = vunpack.c.l.b16 %v300
    %v447 = vunpack.c.h.b16 %v300
    %v448 = vunpack.c.l.b16 %v301
    %v449 = vunpack.c.h.b16 %v301
    %v450 = vunpack.c.l.b16 %v302
    %v451 = vunpack.c.h.b16 %v302
    %v452 = vunpack.c.l.b16 %v303
    %v453 = vunpack.c.h.b16 %v303
    %v454 = vunpack.c.l.b16 %v304
    %v455 = vunpack.c.h.b16 %v304
    %v456 = vunpack.c.l.b16 %v305
    %v457 = vunpack.c.h.b16 %v305
    %v458 = vunpack.c.l.b16 %v306
    %v459 = vunpack.c.h.b16 %v306
    %v460 = vunpack.c.l.b16 %v307
    %v461 = vunpack.c.h.b16 %v307
    %v462 = vunpack.c.l.b16 %v308
    %v463 = vunpack.c.h.b16 %v308
    %v464 = vunpack.c.l.b16 %v309
    %v465 = vunpack.c.h.b16 %v309
    %v466 = vunpack.c.l.b16 %v310
    %v467 = vunpack.c.h.b16 %v310
    %v468 = vunpack.c.l.b16 %v311
    %v469 = vunpack.c.h.b16 %v311
    %v470 = vunpack.c.l.b16 %v312
    %v471 = vunpack.c.h.b16 %v312
    %v472 = vunpack.c.l.b16 %v313
    %v473 = vunpack.c.h.b16 %v313
    %v474 = vunpack.c.l.b16 %v314
    %v475 = vunpack.c.h.b16 %v314
    %v476 = vunpack.c.l.b16 %v315
    %v477 = vunpack.c.h.b16 %v315
    %v478 = vunpack.c.l.b16 %v316
    %v479 = vunpack.c.h.b16 %v316
    %v480 = vunpack.c.l.b16 %v317
    %v481 = vunpack.c.h.b16 %v317
    %v482 = vunpack.c.l.b16 %v318
    %v483 = vunpack.c.h.b16 %v318
    %v484 = vunpack.c.l.b16 %v319
    %v485 = vunpack.c.h.b16 %v319
    %v486 = vunpack.c.l.b16 %v320
    %v487 = vunpack.c.h.b16 %v320
    %v488 = vunpack.c.l.b16 %v321
    %v489 = vunpack.c.h.b16 %v321
    %v490 = vunpack.c.l.b16 %v322
    %v491 = vunpack.c.h.b16 %v322
    %v492 = vunpack.c.l.b16 %v323
    %v493 = vunpack.c.h.b16 %v323
    %v494 = vunpack.c.l.b16 %v324
    %v495 = vunpack.c.h.b16 %v324
    %v496 = vunpack.c.l.b16 %v325
    %v497 = vunpack.c.h.b16 %v325
    %v498 = vunpack.c.l.b16 %v326
    %v499 = vunpack.c.h.b16 %v326
    %v500 = vunpack.c.l.b16 %v327
    %v501 = vunpack.c.h.b16 %v327
    %v502 = vunpack.c.l.b16 %v328
    %v503 = vunpack.c.h.b16 %v328
    %v504 = vunpack.c.l.b16 %v329
    %v505 = vunpack.c.h.b16 %v329
    %v506 = vunpack.c.l.b16 %v330
    %v507 = vunpack.c.h.b16 %v330
    %v508 = vunpack.c.l.b16 %v331
    %v509 = vunpack.c.h.b16 %v331
    %v510 = vunpack.c.l.b16 %v332
    %v511 = vunpack.c.h.b16 %v332
    %v512 = vunpack.c.l.b16 %v333
    %v513 = vunpack.c.h.b16 %v333
    %v514 = vunpack.c.l.b16 %v334
    %v515 = vunpack.c.h.b16 %v334
    %v516 = vunpack.c.l.b16 %v335
    %v517 = vunpack.c.h.b16 %v335
    %v518 = vunpack.c.l.b16 %v336
    %v519 = vunpack.c.h.b16 %v336
    %v520 = vunpack.c.l.b16 %v337
    %v521 = vunpack.c.h.b16 %v337
    %v522 = vunpack.c.l.b16 %v338
    %v523 = vunpack.c.h.b16 %v338
    %v524 = vunpack.c.l.b16 %v339
    %v525 = vunpack.c.h.b16 %v339
    %v526 = vunpack.c.l.b16 %v340
    %v527 = vunpack.c.h.b16 %v340
    %v528 = vunpack.c.l.b16 %v341
    %v529 = vunpack.c.h.b16 %v341
    %v530 = vunpack.c.l.b16 %v342
    %v531 = vunpack.c.h.b16 %v342
    %v532 = vunpack.c.l.b16 %v343
    %v533 = vunpack.c.h.b16 %v343
    %v534 = vunpack.c.l.b16 %v344
    %v535 = vunpack.c.h.b16 %v344
    %v536 = vunpack.c.l.b16 %v345
    %v537 = vunpack.c.h.b16 %v345
    %v538 = vunpack.c.l.b16 %v346
    %v539 = vunpack.c.h.b16 %v346
    %v540 = vunpack.c.l.b16 %v347
    %v541 = vunpack.c.h.b16 %v347
    %v542 = vunpack.c.l.b16 %v348
    %v543 = vunpack.c.h.b16 %v348
    %v544 = vunpack.c.l.b16 %v349
    %v545 = vunpack.c.h.b16 %v349
    %v546 = vunpack.c.l.b16 %v350
    %v547 = vunpack.c.h.b16 %v350
    %v548 = vunpack.c.l.b16 %v351
    %v549 = vunpack.c.h.b16 %v351
    %v550 = vunpack.c.l.b16 %v352
    %v551 = vunpack.c.h.b16 %v352
    %v552 = vunpack.c.l.b16 %v353
    %v553 = vunpack.c.h.b16 %v353
    %v554 = vunpack.c.l.b16 %v354
    %v555 = vunpack.c.h.b16 %v354
    %v556 = vpack.c.b16 %v432, %v428
    %v557 = vpack.c.b16 %v433, %v429
    %v558 = vpack.c.b16 %v434, %v430
    %v559 = vpack.c.b16 %v435, %v431
    %v560 = vpack.c.b16 %v440, %v436
    %v561 = vpack.c.b16 %v441, %v437
    %v562 = vpack.c.b16 %v442, %v438
    %v563 = vpack.c.b16 %v443, %v439
    %v564 = vpack.c.b16 %v448, %v444
    %v565 = vpack.c.b16 %v449, %v445
    %v566 = vpack.c.b16 %v450, %v446
    %v567 = vpack.c.b16 %v451, %v447
    %v568 = vpack.c.b16 %v456, %v452
    %v569 = vpack.c.b16 %v457, %v453
    %v570 = vpack.c.b16 %v458, %v454
    %v571 = vpack.c.b16 %v459, %v455
    %v572 = vpack.c.b16 %v464, %v460
    %v573 = vpack.c.b16 %v465, %v461
    %v574 = vpack.c.b16 %v466, %v462
    %v575 = vpack.c.b16 %v467, %v463
    %v576 = vpack.c.b16 %v472, %v468
    %v577 = vpack.c.b16 %v473, %v469
    %v578 = vpack.c.b16 %v474, %v470
    %v579 = vpack.c.b16 %v475, %v471
    %v580 = vpack.c.b16 %v480, %v476
    %v581 = vpack.c.b16 %v481, %v477
    %v582 = vpack.c.b16 %v482, %v478
    %v583 = vpack.c.b16 %v483, %v479
    %v584 = vpack.c.b16 %v488, %v484
    %v585 = vpack.c.b16 %v489, %v485
    %v586 = vpack.c.b16 %v490, %v486
    %v587 = vpack.c.b16 %v491, %v487
    %v588 = vpack.c.b16 %v496, %v492
    %v589 = vpack.c.b16 %v497, %v493
    %v590 = vpack.c.b16 %v498, %v494
    %v591 = vpack.c.b16 %v499, %v495
    %v592 = vpack.c.b16 %v504, %v500
    %v593 = vpack.c.b16 %v505, %v501
    %v594 = vpack.c.b16 %v506, %v502
    %v595 = vpack.c.b16 %v507, %v503
    %v596 = vpack.c.b16 %v512, %v508
    %v597 = vpack.c.b16 %v513, %v509
    %v598 = vpack.c.b16 %v514, %v510
    %v599 = vpack.c.b16 %v515, %v511
    %v600 = vpack.c.b16 %v520, %v516
    %v601 = vpack.c.b16 %v521, %v517
    %v602 = vpack.c.b16 %v522, %v518
    %v603 = vpack.c.b16 %v523, %v519
    %v604 = vpack.c.b16 %v528, %v524
    %v605 = vpack.c.b16 %v529, %v525
    %v606 = vpack.c.b16 %v530, %v526
    %v607 = vpack.c.b16 %v531, %v527
    %v608 = vpack.c.b16 %v536, %v532
    %v609 = vpack.c.b16 %v537, %v533
    %v610 = vpack.c.b16 %v538, %v534
    %v611 = vpack.c.b16 %v539, %v535
    %v612 = vpack.c.b16 %v544, %v540
    %v613 = vpack.c.b16 %v545, %v541
    %v614 = vpack.c.b16 %v546, %v542
    %v615 = vpack.c.b16 %v547, %v543
    %v616 = vpack.c.b16 %v552, %v548
    %v617 = vpack.c.b16 %v553, %v549
    %v618 = vpack.c.b16 %v554, %v550
    %v619 = vpack.c.b16 %v555, %v551
    %684 = vmatpush.bf16.msra.mxu0 %v584
    %685 = vmatpush.bf16.msra.mxu0 %v580
    %686 = vmatpush.bf16.msra.mxu0 %v576
    %687 = vmatpush.bf16.msra.mxu0 %v572
    %688 = vmatpush.bf16.msra.mxu0 %v568
    %689 = vmatpush.bf16.msra.mxu0 %v564
    %690 = vmatpush.bf16.msra.mxu0 %v560
    %691 = vmatpush.bf16.msra.mxu0 %v556
    %692 = vmatmul.bf16.gmra.mxu0 %v289
    %v693 = vpop.f32.mrf.mxu0
    %v694 = vadd.f32 %v356, %v693
    %v695 = vpop.f32.mrf.mxu0
    %696 = vdwg.mxu0
    %697 = vmatpush.bf16.msra.mxu0 %v616
    %698 = vmatpush.bf16.msra.mxu0 %v612
    %699 = vmatpush.bf16.msra.mxu0 %v608
    %700 = vmatpush.bf16.msra.mxu0 %v604
    %701 = vmatpush.bf16.msra.mxu0 %v600
    %702 = vmatpush.bf16.msra.mxu0 %v596
    %703 = vmatpush.bf16.msra.mxu0 %v592
    %704 = vmatpush.bf16.msra.mxu0 %v588
    %705 = vmatmul.bf16.gmra.mxu0 %v290
    %v706 = vpop.f32.mrf.mxu0
    %v707 = vadd.f32 %v694, %v706
    %v708 = vpop.f32.mrf.mxu0
    %709 = vdwg.mxu0
    %710 = vmatpush.bf16.msra.mxu0 %v585
    %711 = vmatpush.bf16.msra.mxu0 %v581
    %712 = vmatpush.bf16.msra.mxu0 %v577
    %713 = vmatpush.bf16.msra.mxu0 %v573
    %714 = vmatpush.bf16.msra.mxu0 %v569
    %715 = vmatpush.bf16.msra.mxu0 %v565
    %716 = vmatpush.bf16.msra.mxu0 %v561
    %717 = vmatpush.bf16.msra.mxu0 %v557
    %718 = vmatmul.bf16.gmra.mxu0 %v289
    %v719 = vpop.f32.mrf.mxu0
    %v720 = vadd.f32 %v357, %v719
    %v721 = vpop.f32.mrf.mxu0
    %722 = vdwg.mxu0
    %723 = vmatpush.bf16.msra.mxu0 %v617
    %724 = vmatpush.bf16.msra.mxu0 %v613
    %725 = vmatpush.bf16.msra.mxu0 %v609
    %726 = vmatpush.bf16.msra.mxu0 %v605
    %727 = vmatpush.bf16.msra.mxu0 %v601
    %728 = vmatpush.bf16.msra.mxu0 %v597
    %729 = vmatpush.bf16.msra.mxu0 %v593
    %730 = vmatpush.bf16.msra.mxu0 %v589
    %731 = vmatmul.bf16.gmra.mxu0 %v290
    %v732 = vpop.f32.mrf.mxu0
    %v733 = vadd.f32 %v720, %v732
    %v734 = vpop.f32.mrf.mxu0
    %735 = vdwg.mxu0
    %736 = vmatpush.bf16.msra.mxu0 %v586
    %737 = vmatpush.bf16.msra.mxu0 %v582
    %738 = vmatpush.bf16.msra.mxu0 %v578
    %739 = vmatpush.bf16.msra.mxu0 %v574
    %740 = vmatpush.bf16.msra.mxu0 %v570
    %741 = vmatpush.bf16.msra.mxu0 %v566
    %742 = vmatpush.bf16.msra.mxu0 %v562
    %743 = vmatpush.bf16.msra.mxu0 %v558
    %744 = vmatmul.bf16.gmra.mxu0 %v289
    %v745 = vpop.f32.mrf.mxu0
    %v746 = vadd.f32 %v358, %v745
    %v747 = vpop.f32.mrf.mxu0
    %748 = vdwg.mxu0
    %749 = vmatpush.bf16.msra.mxu0 %v618
    %750 = vmatpush.bf16.msra.mxu0 %v614
    %751 = vmatpush.bf16.msra.mxu0 %v610
    %752 = vmatpush.bf16.msra.mxu0 %v606
    %753 = vmatpush.bf16.msra.mxu0 %v602
    %754 = vmatpush.bf16.msra.mxu0 %v598
    %755 = vmatpush.bf16.msra.mxu0 %v594
    %756 = vmatpush.bf16.msra.mxu0 %v590
    %757 = vmatmul.bf16.gmra.mxu0 %v290
    %v758 = vpop.f32.mrf.mxu0
    %v759 = vadd.f32 %v746, %v758
    %v760 = vpop.f32.mrf.mxu0
    %761 = vdwg.mxu0
    %762 = vmatpush.bf16.msra.mxu0 %v587
    %763 = vmatpush.bf16.msra.mxu0 %v583
    %764 = vmatpush.bf16.msra.mxu0 %v579
    %765 = vmatpush.bf16.msra.mxu0 %v575
    %766 = vmatpush.bf16.msra.mxu0 %v571
    %767 = vmatpush.bf16.msra.mxu0 %v567
    %768 = vmatpush.bf16.msra.mxu0 %v563
    %769 = vmatpush.bf16.msra.mxu0 %v559
    %770 = vmatmul.bf16.gmra.mxu0 %v289
    %v771 = vpop.f32.mrf.mxu0
    %v772 = vadd.f32 %v359, %v771
    %v773 = vpop.f32.mrf.mxu0
    %774 = vdwg.mxu0
    %775 = vmatpush.bf16.msra.mxu0 %v619
    %776 = vmatpush.bf16.msra.mxu0 %v615
    %777 = vmatpush.bf16.msra.mxu0 %v611
    %778 = vmatpush.bf16.msra.mxu0 %v607
    %779 = vmatpush.bf16.msra.mxu0 %v603
    %780 = vmatpush.bf16.msra.mxu0 %v599
    %781 = vmatpush.bf16.msra.mxu0 %v595
    %782 = vmatpush.bf16.msra.mxu0 %v591
    %783 = vmatmul.bf16.gmra.mxu0 %v290
    %v784 = vpop.f32.mrf.mxu0
    %v785 = vadd.f32 %v772, %v784
    %v786 = vpop.f32.mrf.mxu0
    %787 = vdwg.mxu0
    %v788 = vmul.f32 %v759, 0.5
    %v789 = vmul.f32 %v785, 0.5
    %v790 = vmul.f32 %v788, 1.442695
    %v791 = vpow.pop %v790
    %v792 = vmul.f32 %v789, 1.442695
    %v793 = vpow.pop %v792
    %v794 = vld [vmem:[#allocation7] sm:$0xf]
    %796 = vst [vmem:[#allocation1] ss:$4 sm:$0xff] %v794
    %v797 = vld.sshfl [vmem:[#allocation1] sm:$0xff pattern:$0x73625140]
    %v798 = vld.sshfl [vmem:[#allocation1 + $0x8] sm:$0xff pattern:$0x73625140]
    %v801 = vmul.f32 %v791, %v797
    %v802 = vmul.f32 %v793, %v798
    %v803 = vadd.f32 %v707, %v801
    %v804 = vadd.f32 %v733, %v802
    %v807 = vrot.slane %v804, 6
    %vm808 = vcmask 1041408
    %v809 = vsel %vm808, %v803, %v807
    %811 = vst [vmem:[#allocation14] sm:$0xf] %v809
    %v814 = vrot.slane %v733, 6
    %v815 = vsel %vm808, %v707, %v814
    %817 = vst [vmem:[#allocation14 + $0x4] sm:$0xf] %v815
    %v820 = vrot.slane %v785, 6
    %v821 = vsel %vm808, %v759, %v820
    %823 = vst [vmem:[#allocation14 + $0x8] sm:$0xf] %v821
    %v826 = vrot.slane %v793, 6
    %v827 = vsel %vm808, %v791, %v826
    %829 = vst [vmem:[#allocation14 + $0xc] sm:$0xf] %v827
    // Predicated region
    $region58: #{tpu_custom_call.1} parent=1 // pred_check
      _
    $region59: #{tpu_custom_call.1} parent=1 // pred_check_branch
      %831 = sbr.rel (0) target = $region61
    $region60: #{tpu_custom_call.1} parent=1 // pred_region
      %833 = vsyncadd [#allocation4], 0
      %s835 = sshll.u32 [#allocation14], 4
      %s836 = int_to_ptr.vmem [resolvable:$true] %s835
      %s837 = sshll.u32 %s7, 4
      %s838 = int_to_ptr.hbm [resolvable:$true] %s837
      %840 = dma.vmem_to_hbm [thread:$0]  %s836, 256, %s838, [#allocation4]
    $region61: #{tpu_custom_call.1} parent=1 // pred_fallthru
      _
    // Predicated region
    $region62: #{tpu_custom_call.1} parent=1 // pred_check
      _
    $region63: #{tpu_custom_call.1} parent=1 // pred_check_branch
      %842 = sbr.rel (0) target = $region65
    $region64: #{tpu_custom_call.1} parent=1 // pred_region
      %844 = dma.done [#allocation4], 256
    $region65: #{tpu_custom_call.1} parent=1 // pred_fallthru
      _
    %845 = vsyncpa [#allocation3], 1
    %846 = vsyncpa [#allocation6], 1
    %847 = vsyncpa [#allocation9], 1
    %848 = vsyncpa [#allocation12], 1
    %849 = vsyncpa [#allocation4], 1

</llo_original>
